<compile_context>
chip_gen: v6e
topology: v6e:2x2x1
jax: 0.10.0
libtpu: 0.0.40
codegen_flags: <defaults>
</compile_context>

<pallas_src>
import functools

import jax
import jax.numpy as jnp
from jax.experimental import pallas as pl
from jax.experimental.pallas import tpu as pltpu

SUBLANE = 8            # f32 sublane width (second-to-last dim)
MAX_BATCH_TILE = 512   # bigger tiles -> better HBM writeback utilization


def _round_up(x, m):
    return pl.cdiv(x, m) * m


def _choose_batch_tiling(batch):
    """Pick (b_pad, tile): tiles are sublane multiples, capped at
    MAX_BATCH_TILE, and the grid has >= 2 steps whenever the batch allows it
    (so v7x's two TensorCores can both be used via the "parallel" axis)."""
    b_pad = _round_up(max(batch, SUBLANE), SUBLANE)
    if b_pad <= SUBLANE:
        return b_pad, b_pad
    tb = min(MAX_BATCH_TILE, _round_up(pl.cdiv(b_pad, 2), SUBLANE))
    b_pad = _round_up(b_pad, tb)
    return b_pad, tb


# -----------------------------------------------------------------------------
# Pallas kernel: fused 3-layer MLP on one batch tile.
#   z:  (TB, 100) f32      w1: (100, 128) bf16   b1: (1, 128) f32
#                          w2: (128, 256) bf16   b2: (1, 256) f32
#                          w3: (256, 784) bf16   b3: (1, 784) f32
#   out:(TB, 784) f32
# Weights/biases use a constant index_map, so they are loaded once and stay
# resident in VMEM while the grid walks the batch tiles.  MXU inputs are bf16,
# accumulation is f32.
# -----------------------------------------------------------------------------
def _generator_kernel(z_ref, w1_ref, b1_ref, w2_ref, b2_ref, w3_ref, b3_ref,
                      out_ref):
    z = z_ref[...].astype(jnp.bfloat16)

    # Layer 1: Linear(latent -> 128) + ReLU
    h1 = jnp.dot(z, w1_ref[...], preferred_element_type=jnp.float32)
    h1 = jnp.maximum(h1 + b1_ref[...], 0.0)

    # Layer 2: Linear(128 -> 256) + ReLU
    h2 = jnp.dot(h1.astype(jnp.bfloat16), w2_ref[...],
                 preferred_element_type=jnp.float32)
    h2 = jnp.maximum(h2 + b2_ref[...], 0.0)

    # Layer 3: Linear(256 -> 784) + Tanh, stored directly at the true width.
    h3 = jnp.dot(h2.astype(jnp.bfloat16), w3_ref[...],
                 preferred_element_type=jnp.float32)
    out_ref[...] = jnp.tanh(h3 + b3_ref[...])


def prepare_generator_params(params, latent_dim=100, img_shape=(1, 28, 28)):
    """One-time conversion of PyTorch-style params (out,in)/(out,) into the
    kernel layout: weights transposed to (in, out) and cast to bf16, biases
    kept f32 as (1, N) rows. No lane padding is needed anymore."""
    del latent_dim  # shapes come from the params themselves
    w1, b1, w2, b2, w3, b3 = params
    img_dim = img_shape[0] * img_shape[1] * img_shape[2]
    assert w3.shape[0] == img_dim

    w1t = jnp.asarray(w1, jnp.float32).T.astype(jnp.bfloat16)   # (100, 128)
    b1r = jnp.asarray(b1, jnp.float32).reshape(1, -1)            # (1, 128)
    w2t = jnp.asarray(w2, jnp.float32).T.astype(jnp.bfloat16)   # (128, 256)
    b2r = jnp.asarray(b2, jnp.float32).reshape(1, -1)            # (1, 256)
    w3t = jnp.asarray(w3, jnp.float32).T.astype(jnp.bfloat16)   # (256, 784)
    b3r = jnp.asarray(b3, jnp.float32).reshape(1, -1)            # (1, 784)
    return (w1t, b1r, w2t, b2r, w3t, b3r)


@functools.partial(jax.jit, static_argnames=("img_shape",))
def generator_forward(z, prepared_params, img_shape=(1, 28, 28)):
    """Runs the fused generator MLP in a batch-tiled Pallas kernel."""
    w1t, b1r, w2t, b2r, w3t, b3r = prepared_params
    batch, latent_dim = z.shape
    img_dim = img_shape[0] * img_shape[1] * img_shape[2]

    h1 = w1t.shape[1]          # 128
    h2 = w2t.shape[1]          # 256
    assert w3t.shape[1] == img_dim

    # --- static batch tiling --------------------------------------------
    b_pad, tb = _choose_batch_tiling(batch)
    grid = (b_pad // tb,)

    zf = z.astype(jnp.float32)
    if b_pad != batch:
        # Only the batch dim is padded (rows of zeros -> tanh(bias) garbage
        # that is sliced off below); no K padding / no extra z copy otherwise.
        zp = jnp.zeros((b_pad, latent_dim), jnp.float32).at[:batch, :].set(zf)
    else:
        zp = zf

    flops = 2 * b_pad * (latent_dim * h1 + h1 * h2 + h2 * img_dim)
    bytes_accessed = (
        4 * (b_pad * latent_dim + b_pad * img_dim)                 # z in, out
        + 2 * (latent_dim * h1 + h1 * h2 + h2 * img_dim)           # bf16 weights
        + 4 * (h1 + h2 + img_dim)                                  # f32 biases
    )
    cost = pl.CostEstimate(flops=flops,
                           transcendentals=b_pad * img_dim,
                           bytes_accessed=bytes_accessed)

    flat = pl.pallas_call(
        _generator_kernel,
        out_shape=jax.ShapeDtypeStruct((b_pad, img_dim), jnp.float32),
        grid=grid,
        in_specs=[
            pl.BlockSpec((tb, latent_dim), lambda i: (i, 0)),   # z: per batch tile
            pl.BlockSpec((latent_dim, h1), lambda i: (0, 0)),   # w1: resident
            pl.BlockSpec((1, h1),          lambda i: (0, 0)),   # b1: resident
            pl.BlockSpec((h1, h2),         lambda i: (0, 0)),   # w2: resident
            pl.BlockSpec((1, h2),          lambda i: (0, 0)),   # b2: resident
            pl.BlockSpec((h2, img_dim),    lambda i: (0, 0)),   # w3: resident
            pl.BlockSpec((1, img_dim),     lambda i: (0, 0)),   # b3: resident
        ],
        out_specs=pl.BlockSpec((tb, img_dim), lambda i: (i, 0)),
        compiler_params=pltpu.CompilerParams(
            dimension_semantics=("parallel",),
            vmem_limit_bytes=32 * 1024 * 1024),
        cost_estimate=cost,
    )(zp, w1t, b1r, w2t, b2r, w3t, b3r)

    out = flat if b_pad == batch else flat[:batch]
    # Reshape to NCHW like `img.view(z.size(0), *self.img_shape)`.
    return out.reshape((batch,) + tuple(img_shape))


def init_generator_params(key, latent_dim=100, img_shape=(1, 28, 28)):
    """Deterministic init mimicking PyTorch nn.Linear default U(-1/sqrt(fan_in), +)."""
    img_dim = img_shape[0] * img_shape[1] * img_shape[2]
    dims = [(128, latent_dim), (256, 128), (img_dim, 256)]
    params = []
    for i, (fan_out, fan_in) in enumerate(dims):
        kw, kb = jax.random.split(jax.random.fold_in(key, i))
        bound = 1.0 / jnp.sqrt(jnp.float32(fan_in))
        w = jax.random.uniform(kw, (fan_out, fan_in), jnp.float32, -bound, bound)
        b = jax.random.uniform(kb, (fan_out,), jnp.float32, -bound, bound)
        params.extend([w, b])
    return tuple(params)


# Pure-JAX float32 reference for the self-check (raw PyTorch-layout params).
def _reference_forward(z, params, img_shape=(1, 28, 28)):
    w1, b1, w2, b2, w3, b3 = params
    h = jnp.maximum(z @ w1.T + b1, 0.0)
    h = jnp.maximum(h @ w2.T + b2, 0.0)
    h = jnp.tanh(h @ w3.T + b3)
    return h.reshape((z.shape[0],) + tuple(img_shape))


if __name__ == "__main__":
    key = jax.random.PRNGKey(0)
    latent_dim = 100
    img_shape = (1, 28, 28)

    pkey, zkey = jax.random.split(key)
    raw_params = init_generator_params(pkey, latent_dim, img_shape)
    # One-time weight prep (transpose + bf16 cast) outside the hot path.
    prepared = prepare_generator_params(raw_params, latent_dim, img_shape)

    # bf16 MXU inputs with f32 accumulation -> tolerance loosened vs the pure
    # f32 reference (error through the 3 small layers is well under 1e-2).
    ATOL = 3e-2
    RTOL = 3e-2

    # Small demo batch (matches the module's expected usage).
    batch = 2
    z = jax.random.normal(zkey, (batch, latent_dim), jnp.float32)
    img = jax.block_until_ready(generator_forward(z, prepared, img_shape))
    assert img.shape == (batch,) + img_shape, img.shape
    ref = _reference_forward(z, raw_params, img_shape)
    assert jnp.allclose(img, ref, atol=ATOL, rtol=RTOL)

    # Second check with a batch that exercises padding + a 2-step grid.
    batch2 = 17
    z2 = jax.random.normal(jax.random.fold_in(zkey, 1), (batch2, latent_dim),
                           jnp.float32)
    img2 = jax.block_until_ready(generator_forward(z2, prepared, img_shape))
    ref2 = _reference_forward(z2, raw_params, img_shape)
    assert img2.shape == (batch2,) + img_shape, img2.shape
    assert jnp.allclose(img2, ref2, atol=ATOL, rtol=RTOL)

    print("KERNEL_OK")
</pallas_src>

<mosaic_0001>
module attributes {stable_mosaic.version = 11 : i64} {
  func.func @_generator_kernel(%arg0: i32, %arg1: memref<8x100xf32, #tpu.memory_space<vmem>>, %arg2: memref<100x128xbf16, #tpu.memory_space<vmem>>, %arg3: memref<1x128xf32, #tpu.memory_space<vmem>>, %arg4: memref<128x256xbf16, #tpu.memory_space<vmem>>, %arg5: memref<1x256xf32, #tpu.memory_space<vmem>>, %arg6: memref<256x784xbf16, #tpu.memory_space<vmem>>, %arg7: memref<1x784xf32, #tpu.memory_space<vmem>>, %arg8: memref<8x784xf32, #tpu.memory_space<vmem>>) attributes {dimension_semantics = [#tpu.dimension_semantics<parallel>], iteration_bounds = array<i64: 1>, scalar_prefetch = 0 : i64, scratch_operands = 0 : i64, tpu.core_type = #tpu.core_type<tc>, window_params = [{transform_indices = @transform_0, window_bounds = array<i64: 8, 100>}, {pipeline_mode = #tpu.pipeline_mode<synchronous>, transform_indices = @transform_1, window_bounds = array<i64: 100, 128>}, {pipeline_mode = #tpu.pipeline_mode<synchronous>, transform_indices = @transform_2, window_bounds = array<i64: 1, 128>}, {pipeline_mode = #tpu.pipeline_mode<synchronous>, transform_indices = @transform_3, window_bounds = array<i64: 128, 256>}, {pipeline_mode = #tpu.pipeline_mode<synchronous>, transform_indices = @transform_4, window_bounds = array<i64: 1, 256>}, {pipeline_mode = #tpu.pipeline_mode<synchronous>, transform_indices = @transform_5, window_bounds = array<i64: 256, 784>}, {pipeline_mode = #tpu.pipeline_mode<synchronous>, transform_indices = @transform_6, window_bounds = array<i64: 1, 784>}, {transform_indices = @transform_7, window_bounds = array<i64: 8, 784>}]} {
    %c0 = arith.constant 0 : index
    %c0_0 = arith.constant 0 : index
    %0 = vector.load %arg1[%c0, %c0_0] : memref<8x100xf32, #tpu.memory_space<vmem>>, vector<8x100xf32>
    %1 = arith.truncf %0 : vector<8x100xf32> to vector<8x100xbf16>
    %c0_1 = arith.constant 0 : index
    %c0_2 = arith.constant 0 : index
    %2 = vector.load %arg2[%c0_1, %c0_2] : memref<100x128xbf16, #tpu.memory_space<vmem>>, vector<100x128xbf16>
    %cst = arith.constant dense<0.000000e+00> : vector<8x128xf32>
    %3 = tpu.matmul %1, %2, %cst {dimension_numbers = #tpu.dot_dimension_numbers<[1], [0], [0], [1], [0, 0, 1, 1], [], []>} : vector<8x100xbf16>, vector<100x128xbf16>, vector<8x128xf32> -> vector<8x128xf32>
    %c0_3 = arith.constant 0 : index
    %c0_4 = arith.constant 0 : index
    %4 = vector.load %arg3[%c0_3, %c0_4] : memref<1x128xf32, #tpu.memory_space<vmem>>, vector<1x128xf32>
    %5 = vector.broadcast %4 : vector<1x128xf32> to vector<8x128xf32>
    %6 = arith.addf %3, %5 : vector<8x128xf32>
    %cst_5 = arith.constant 0.000000e+00 : f32
    %7 = vector.broadcast %cst_5 : f32 to vector<8x128xf32>
    %8 = arith.maximumf %6, %7 : vector<8x128xf32>
    %9 = arith.truncf %8 : vector<8x128xf32> to vector<8x128xbf16>
    %c0_6 = arith.constant 0 : index
    %c0_7 = arith.constant 0 : index
    %10 = vector.load %arg4[%c0_6, %c0_7] : memref<128x256xbf16, #tpu.memory_space<vmem>>, vector<128x256xbf16>
    %cst_8 = arith.constant dense<0.000000e+00> : vector<8x256xf32>
    %11 = tpu.matmul %9, %10, %cst_8 {dimension_numbers = #tpu.dot_dimension_numbers<[1], [0], [0], [1], [0, 0, 1, 1], [], []>} : vector<8x128xbf16>, vector<128x256xbf16>, vector<8x256xf32> -> vector<8x256xf32>
    %c0_9 = arith.constant 0 : index
    %c0_10 = arith.constant 0 : index
    %12 = vector.load %arg5[%c0_9, %c0_10] : memref<1x256xf32, #tpu.memory_space<vmem>>, vector<1x256xf32>
    %13 = vector.broadcast %12 : vector<1x256xf32> to vector<8x256xf32>
    %14 = arith.addf %11, %13 : vector<8x256xf32>
    %cst_11 = arith.constant 0.000000e+00 : f32
    %15 = vector.broadcast %cst_11 : f32 to vector<8x256xf32>
    %16 = arith.maximumf %14, %15 : vector<8x256xf32>
    %17 = arith.truncf %16 : vector<8x256xf32> to vector<8x256xbf16>
    %c0_12 = arith.constant 0 : index
    %c0_13 = arith.constant 0 : index
    %18 = vector.load %arg6[%c0_12, %c0_13] : memref<256x784xbf16, #tpu.memory_space<vmem>>, vector<256x784xbf16>
    %cst_14 = arith.constant dense<0.000000e+00> : vector<8x784xf32>
    %19 = tpu.matmul %17, %18, %cst_14 {dimension_numbers = #tpu.dot_dimension_numbers<[1], [0], [0], [1], [0, 0, 1, 1], [], []>} : vector<8x256xbf16>, vector<256x784xbf16>, vector<8x784xf32> -> vector<8x784xf32>
    %c0_15 = arith.constant 0 : index
    %c0_16 = arith.constant 0 : index
    %20 = vector.load %arg7[%c0_15, %c0_16] : memref<1x784xf32, #tpu.memory_space<vmem>>, vector<1x784xf32>
    %21 = vector.broadcast %20 : vector<1x784xf32> to vector<8x784xf32>
    %22 = arith.addf %19, %21 : vector<8x784xf32>
    %23 = math.tanh %22 : vector<8x784xf32>
    %c0_17 = arith.constant 0 : index
    %c0_18 = arith.constant 0 : index
    %24 = vector.load %arg8[%c0_17, %c0_18] : memref<8x784xf32, #tpu.memory_space<vmem>>, vector<8x784xf32>
    tpu.vector_store %arg8[%c0_17, %c0_18], %23 {strides = array<i32>} : memref<8x784xf32, #tpu.memory_space<vmem>>, vector<8x784xf32>,
    return
  }
  func.func @transform_0(%arg0: i32) -> (i32, i32) {
    %c0_i32 = arith.constant 0 : i32
    %c0_i32_0 = arith.constant 0 : i32
    return %arg0, %c0_i32 : i32, i32
  }
  func.func @transform_1(%arg0: i32) -> (i32, i32) {
    %c0_i32 = arith.constant 0 : i32
    %c0_i32_0 = arith.constant 0 : i32
    %c0_i32_1 = arith.constant 0 : i32
    return %c0_i32, %c0_i32_0 : i32, i32
  }
  func.func @transform_2(%arg0: i32) -> (i32, i32) {
    %c0_i32 = arith.constant 0 : i32
    %c0_i32_0 = arith.constant 0 : i32
    %c0_i32_1 = arith.constant 0 : i32
    return %c0_i32, %c0_i32_0 : i32, i32
  }
  func.func @transform_3(%arg0: i32) -> (i32, i32) {
    %c0_i32 = arith.constant 0 : i32
    %c0_i32_0 = arith.constant 0 : i32
    %c0_i32_1 = arith.constant 0 : i32
    return %c0_i32, %c0_i32_0 : i32, i32
  }
  func.func @transform_4(%arg0: i32) -> (i32, i32) {
    %c0_i32 = arith.constant 0 : i32
    %c0_i32_0 = arith.constant 0 : i32
    %c0_i32_1 = arith.constant 0 : i32
    return %c0_i32, %c0_i32_0 : i32, i32
  }
  func.func @transform_5(%arg0: i32) -> (i32, i32) {
    %c0_i32 = arith.constant 0 : i32
    %c0_i32_0 = arith.constant 0 : i32
    %c0_i32_1 = arith.constant 0 : i32
    return %c0_i32, %c0_i32_0 : i32, i32
  }
  func.func @transform_6(%arg0: i32) -> (i32, i32) {
    %c0_i32 = arith.constant 0 : i32
    %c0_i32_0 = arith.constant 0 : i32
    %c0_i32_1 = arith.constant 0 : i32
    return %c0_i32, %c0_i32_0 : i32, i32
  }
  func.func @transform_7(%arg0: i32) -> (i32, i32) {
    %c0_i32 = arith.constant 0 : i32
    %c0_i32_0 = arith.constant 0 : i32
    return %arg0, %c0_i32 : i32, i32
  }
}

</mosaic_0001>

<llo_original>
// kernel: generator_forward.1
$region0: #{generator_forward.1}
  #allocation0 [shape = 'u32[]', space=smem, size = 0x4, offset = 0x4, fixed_abs, tag = 'smem constant byte address 0x4 - core index']
  #allocation1 [shape = 'u32[144,128]{1,0:T(1,128)}', space=vmem, size = 0x12000, scoped, tag = 'internal scratch']
  %s0 = inlined_call_operand.vmem [shape: f32[8,100], index: 0, kind: input, shape index: {}]
  %s1 = inlined_call_operand.vmem [shape: bf16[100,128], index: 1, kind: input, shape index: {}]
  %s2 = inlined_call_operand.vmem [shape: f32[1,128], index: 2, kind: input, shape index: {}]
  %s3 = inlined_call_operand.vmem [shape: bf16[128,256], index: 3, kind: input, shape index: {}]
  %s4 = inlined_call_operand.vmem [shape: f32[1,256], index: 4, kind: input, shape index: {}]
  %s5 = inlined_call_operand.vmem [shape: bf16[256,784], index: 5, kind: input, shape index: {}]
  %s6 = inlined_call_operand.vmem [shape: f32[1,784], index: 6, kind: input, shape index: {}]
  %s7 = inlined_call_operand.vmem [shape: f32[8,784], index: 7, kind: output, shape index: {}]
  %s8 = sld [smem:[#allocation0]]
  $region38: #{generator_forward.1} parent=0
    _
  %s10 = ssub.s32 1, %s8
  %s11 = scalar_select 0, %s10, %s8
  // Predicated region
  $region2: #{generator_forward.1} parent=0 // pred_check
    _
  $region3: #{generator_forward.1} parent=0 // pred_check_branch
    %13 = sbr.rel (0) target = $region5
  $region4: #{generator_forward.1} parent=0 // pred_region
    _
  $region5: #{generator_forward.1} parent=0 // pred_fallthru
    _
  // Predicated region
  $region6: #{generator_forward.1} parent=0 // pred_check
    _
  $region7: #{generator_forward.1} parent=0 // pred_check_branch
    %15 = sbr.rel (0) target = $region9
  $region8: #{generator_forward.1} parent=0 // pred_region
    _
  $region9: #{generator_forward.1} parent=0 // pred_fallthru
    _
  // Predicated region
  $region10: #{generator_forward.1} parent=0 // pred_check
    _
  $region11: #{generator_forward.1} parent=0 // pred_check_branch
    %17 = sbr.rel (0) target = $region13
  $region12: #{generator_forward.1} parent=0 // pred_region
    _
  $region13: #{generator_forward.1} parent=0 // pred_fallthru
    _
  // Predicated region
  $region14: #{generator_forward.1} parent=0 // pred_check
    _
  $region15: #{generator_forward.1} parent=0 // pred_check_branch
    %19 = sbr.rel (0) target = $region17
  $region16: #{generator_forward.1} parent=0 // pred_region
    _
  $region17: #{generator_forward.1} parent=0 // pred_fallthru
    _
  // Predicated region
  $region18: #{generator_forward.1} parent=0 // pred_check
    _
  $region19: #{generator_forward.1} parent=0 // pred_check_branch
    %21 = sbr.rel (0) target = $region21
  $region20: #{generator_forward.1} parent=0 // pred_region
    _
  $region21: #{generator_forward.1} parent=0 // pred_fallthru
    _
  // Predicated region
  $region22: #{generator_forward.1} parent=0 // pred_check
    _
  $region23: #{generator_forward.1} parent=0 // pred_check_branch
    %23 = sbr.rel (0) target = $region25
  $region24: #{generator_forward.1} parent=0 // pred_region
    _
  $region25: #{generator_forward.1} parent=0 // pred_fallthru
    _
  // Predicated region
  $region26: #{generator_forward.1} parent=0 // pred_check
    _
  $region27: #{generator_forward.1} parent=0 // pred_check_branch
    %25 = sbr.rel (0) target = $region29
  $region28: #{generator_forward.1} parent=0 // pred_region
    _
  $region29: #{generator_forward.1} parent=0 // pred_fallthru
    _
  %v27 = vld [vmem:[%s0] sm:$0xff]
  %v28 = vpack.c.bf16 %v27, %v27
  %v29 = vld [vmem:[%s1] sm:$0xf]
  %v30 = vld [vmem:[%s1 + $0x4] sm:$0xf]
  %v31 = vld [vmem:[%s1 + $0x8] sm:$0xf]
  %v32 = vld [vmem:[%s1 + $0xc] sm:$0xf]
  %v33 = vld [vmem:[%s1 + $0x10] sm:$0xf]
  %v34 = vld [vmem:[%s1 + $0x14] sm:$0xf]
  %v35 = vld [vmem:[%s1 + $0x18] sm:$0xf]
  %v36 = vld [vmem:[%s1 + $0x1c] sm:$0xf]
  %v37 = vld [vmem:[%s1 + $0x20] sm:$0xf]
  %v38 = vld [vmem:[%s1 + $0x24] sm:$0xf]
  %v39 = vld [vmem:[%s1 + $0x28] sm:$0xf]
  %v40 = vld [vmem:[%s1 + $0x2c] sm:$0xf]
  %v41 = vld [vmem:[%s1 + $0x30] sm:$0x3]
  %v42 = vld [vmem:[%s2] sm:$0x1]
  %v44 = vlaneseq
  %v45 = vshrl.u32 %v44, 7
  %v46 = vsub.s32 0, %v45
  %v47 = vrot.slane %v42, %v46
  %v62 = vunpack.c.l.b16 %v29
  %v63 = vunpack.c.l.b16 %v30
  %v64 = vunpack.c.l.b16 %v31
  %v65 = vunpack.c.l.b16 %v32
  %v66 = vunpack.c.l.b16 %v33
  %v67 = vunpack.c.l.b16 %v34
  %v68 = vunpack.c.l.b16 %v35
  %v69 = vunpack.c.l.b16 %v36
  %v70 = vunpack.c.l.b16 %v37
  %v71 = vunpack.c.l.b16 %v38
  %v72 = vunpack.c.l.b16 %v39
  %v73 = vunpack.c.l.b16 %v40
  %v74 = vunpack.c.l.b16 %v41
  %v75 = vpack.c.b16 %v63, %v62
  %v76 = vpack.c.b16 %v65, %v64
  %v77 = vpack.c.b16 %v67, %v66
  %v78 = vpack.c.b16 %v69, %v68
  %v79 = vpack.c.b16 %v71, %v70
  %v80 = vpack.c.b16 %v73, %v72
  %v81 = vpack.c.b16 %v74, %v74
  %vm88 = vcmask 818176
  %v90 = vsel %vm88, %v28, 0
  %vm92 = vcmask 1041408
  %v94 = vsel %vm92, %v81, 0
  %96 = vmatprep.subr.bf16.mxu0 0
  %97 = vmatpush1.bf16.msra.mxu0 0
  %98 = vmatprep.subr.bf16.mxu0 0
  %99 = vmatpush1.bf16.msra.mxu0 %v94
  %100 = vmatprep.subr.bf16.mxu0 0
  %101 = vmatpush1.bf16.msra.mxu0 %v80
  %102 = vmatprep.subr.bf16.mxu0 0
  %103 = vmatpush1.bf16.msra.mxu0 %v79
  %104 = vmatprep.subr.bf16.mxu0 0
  %105 = vmatpush1.bf16.msra.mxu0 %v78
  %106 = vmatprep.subr.bf16.mxu0 0
  %107 = vmatpush1.bf16.msra.mxu0 %v77
  %108 = vmatprep.subr.bf16.mxu0 0
  %109 = vmatpush1.bf16.msra.mxu0 %v76
  %110 = vmatprep.subr.bf16.mxu0 0
  %111 = vmatpush1.bf16.msra.mxu0 %v75
  %112 = vmatprep.subr.bf16.mxu0 0
  %113 = vmatpush2.bf16.msra.mxu0 0
  %114 = vmatprep.subr.bf16.mxu0 0
  %115 = vmatpush2.bf16.msra.mxu0 0
  %116 = vmatprep.subr.bf16.mxu0 0
  %117 = vmatpush2.bf16.msra.mxu0 0
  %118 = vmatprep.subr.bf16.mxu0 0
  %119 = vmatpush2.bf16.msra.mxu0 0
  %120 = vmatprep.subr.bf16.mxu0 0
  %121 = vmatpush2.bf16.msra.mxu0 0
  %122 = vmatprep.subr.bf16.mxu0 0
  %123 = vmatpush2.bf16.msra.mxu0 0
  %124 = vmatprep.subr.bf16.mxu0 0
  %125 = vmatpush2.bf16.msra.mxu0 0
  %126 = vmatprep.subr.bf16.mxu0 0
  %127 = vmatpush2.bf16.msra.mxu0 0
  %128 = vmatprep.mubr.bf16.mxu0 0
  %129 = vmatmul.mubr.bf16.gmra.mxu0 %v90
  %v130 = vpop.f32.mrf.mxu0
  %v131 = vadd.f32 %v47, %v130
  %v132 = vpop.f32.mrf.mxu0
  %v133 = vpop.f32.mrf.mxu0
  %v134 = vpop.f32.mrf.mxu0
  %135 = vdwg.mxu0
  %v136 = vmax.f32 %v131, 0.0
  %v137 = vpack.c.bf16 %v136, %v136
  %v138 = vld [vmem:[%s3] sm:$0xff]
  %v139 = vld [vmem:[%s3 + $0x8] sm:$0xff]
  %v140 = vld [vmem:[%s3 + $0x10] sm:$0xff]
  %v141 = vld [vmem:[%s3 + $0x18] sm:$0xff]
  %v142 = vld [vmem:[%s3 + $0x20] sm:$0xff]
  %v143 = vld [vmem:[%s3 + $0x28] sm:$0xff]
  %v144 = vld [vmem:[%s3 + $0x30] sm:$0xff]
  %v145 = vld [vmem:[%s3 + $0x38] sm:$0xff]
  %v146 = vld [vmem:[%s3 + $0x40] sm:$0xff]
  %v147 = vld [vmem:[%s3 + $0x48] sm:$0xff]
  %v148 = vld [vmem:[%s3 + $0x50] sm:$0xff]
  %v149 = vld [vmem:[%s3 + $0x58] sm:$0xff]
  %v150 = vld [vmem:[%s3 + $0x60] sm:$0xff]
  %v151 = vld [vmem:[%s3 + $0x68] sm:$0xff]
  %v152 = vld [vmem:[%s3 + $0x70] sm:$0xff]
  %v153 = vld [vmem:[%s3 + $0x78] sm:$0xff]
  %v154 = vld [vmem:[%s4] sm:$0x3]
  %v156 = vlaneseq
  %v157 = vshrl.u32 %v156, 7
  %v158 = vsub.s32 0, %v157
  %v159 = vrot.slane %v154, %v158
  %v160 = vlaneseq
  %v161 = vshrl.u32 %v160, 7
  %v162 = vsub.s32 1, %v161
  %v163 = vrot.slane %v154, %v162
  %v182 = vunpack.c.l.b16 %v138
  %v183 = vunpack.c.h.b16 %v138
  %v184 = vunpack.c.l.b16 %v139
  %v185 = vunpack.c.h.b16 %v139
  %v186 = vunpack.c.l.b16 %v140
  %v187 = vunpack.c.h.b16 %v140
  %v188 = vunpack.c.l.b16 %v141
  %v189 = vunpack.c.h.b16 %v141
  %v190 = vunpack.c.l.b16 %v142
  %v191 = vunpack.c.h.b16 %v142
  %v192 = vunpack.c.l.b16 %v143
  %v193 = vunpack.c.h.b16 %v143
  %v194 = vunpack.c.l.b16 %v144
  %v195 = vunpack.c.h.b16 %v144
  %v196 = vunpack.c.l.b16 %v145
  %v197 = vunpack.c.h.b16 %v145
  %v198 = vunpack.c.l.b16 %v146
  %v199 = vunpack.c.h.b16 %v146
  %v200 = vunpack.c.l.b16 %v147
  %v201 = vunpack.c.h.b16 %v147
  %v202 = vunpack.c.l.b16 %v148
  %v203 = vunpack.c.h.b16 %v148
  %v204 = vunpack.c.l.b16 %v149
  %v205 = vunpack.c.h.b16 %v149
  %v206 = vunpack.c.l.b16 %v150
  %v207 = vunpack.c.h.b16 %v150
  %v208 = vunpack.c.l.b16 %v151
  %v209 = vunpack.c.h.b16 %v151
  %v210 = vunpack.c.l.b16 %v152
  %v211 = vunpack.c.h.b16 %v152
  %v212 = vunpack.c.l.b16 %v153
  %v213 = vunpack.c.h.b16 %v153
  %v214 = vpack.c.b16 %v184, %v182
  %v215 = vpack.c.b16 %v185, %v183
  %v216 = vpack.c.b16 %v188, %v186
  %v217 = vpack.c.b16 %v189, %v187
  %v218 = vpack.c.b16 %v192, %v190
  %v219 = vpack.c.b16 %v193, %v191
  %v220 = vpack.c.b16 %v196, %v194
  %v221 = vpack.c.b16 %v197, %v195
  %v222 = vpack.c.b16 %v200, %v198
  %v223 = vpack.c.b16 %v201, %v199
  %v224 = vpack.c.b16 %v204, %v202
  %v225 = vpack.c.b16 %v205, %v203
  %v226 = vpack.c.b16 %v208, %v206
  %v227 = vpack.c.b16 %v209, %v207
  %v228 = vpack.c.b16 %v212, %v210
  %v229 = vpack.c.b16 %v213, %v211
  %246 = vmatprep.subr.bf16.mxu0 %v229
  %247 = vmatpush1.bf16.msra.mxu0 %v228
  %248 = vmatprep.subr.bf16.mxu0 %v227
  %249 = vmatpush1.bf16.msra.mxu0 %v226
  %250 = vmatprep.subr.bf16.mxu0 %v225
  %251 = vmatpush1.bf16.msra.mxu0 %v224
  %252 = vmatprep.subr.bf16.mxu0 %v223
  %253 = vmatpush1.bf16.msra.mxu0 %v222
  %254 = vmatprep.subr.bf16.mxu0 %v221
  %255 = vmatpush1.bf16.msra.mxu0 %v220
  %256 = vmatprep.subr.bf16.mxu0 %v219
  %257 = vmatpush1.bf16.msra.mxu0 %v218
  %258 = vmatprep.subr.bf16.mxu0 %v217
  %259 = vmatpush1.bf16.msra.mxu0 %v216
  %260 = vmatprep.subr.bf16.mxu0 %v215
  %261 = vmatpush1.bf16.msra.mxu0 %v214
  %262 = vmatprep.subr.bf16.mxu0 0
  %263 = vmatpush2.bf16.msra.mxu0 0
  %264 = vmatprep.subr.bf16.mxu0 0
  %265 = vmatpush2.bf16.msra.mxu0 0
  %266 = vmatprep.subr.bf16.mxu0 0
  %267 = vmatpush2.bf16.msra.mxu0 0
  %268 = vmatprep.subr.bf16.mxu0 0
  %269 = vmatpush2.bf16.msra.mxu0 0
  %270 = vmatprep.subr.bf16.mxu0 0
  %271 = vmatpush2.bf16.msra.mxu0 0
  %272 = vmatprep.subr.bf16.mxu0 0
  %273 = vmatpush2.bf16.msra.mxu0 0
  %274 = vmatprep.subr.bf16.mxu0 0
  %275 = vmatpush2.bf16.msra.mxu0 0
  %276 = vmatprep.subr.bf16.mxu0 0
  %277 = vmatpush2.bf16.msra.mxu0 0
  %278 = vmatprep.mubr.bf16.mxu0 0
  %279 = vmatmul.mubr.bf16.gmra.mxu0 %v137
  %v280 = vpop.f32.mrf.mxu0
  %v281 = vadd.f32 %v159, %v280
  %v282 = vpop.f32.mrf.mxu0
  %v283 = vadd.f32 %v163, %v282
  %v284 = vpop.f32.mrf.mxu0
  %v285 = vpop.f32.mrf.mxu0
  %286 = vdwg.mxu0
  %v287 = vmax.f32 %v281, 0.0
  %v288 = vmax.f32 %v283, 0.0
  %v289 = vpack.c.bf16 %v287, %v287
  %v290 = vpack.c.bf16 %v288, %v288
  %v291 = vld [vmem:[%s5] sm:$0xff]
  %v292 = vld [vmem:[%s5 + $0x8] sm:$0xff]
  %v293 = vld [vmem:[%s5 + $0x10] sm:$0xff]
  %v294 = vld [vmem:[%s5 + $0x18] sm:$0xf]
  %v295 = vld [vmem:[%s5 + $0x1c] sm:$0xff]
  %v296 = vld [vmem:[%s5 + $0x24] sm:$0xff]
  %v297 = vld [vmem:[%s5 + $0x2c] sm:$0xff]
  %v298 = vld [vmem:[%s5 + $0x34] sm:$0xf]
  %v299 = vld [vmem:[%s5 + $0x38] sm:$0xff]
  %v300 = vld [vmem:[%s5 + $0x40] sm:$0xff]
  %v301 = vld [vmem:[%s5 + $0x48] sm:$0xff]
  %v302 = vld [vmem:[%s5 + $0x50] sm:$0xf]
  %v303 = vld [vmem:[%s5 + $0x54] sm:$0xff]
  %v304 = vld [vmem:[%s5 + $0x5c] sm:$0xff]
  %v305 = vld [vmem:[%s5 + $0x64] sm:$0xff]
  %v306 = vld [vmem:[%s5 + $0x6c] sm:$0xf]
  %v307 = vld [vmem:[%s5 + $0x70] sm:$0xff]
  %v308 = vld [vmem:[%s5 + $0x78] sm:$0xff]
  %v309 = vld [vmem:[%s5 + $0x80] sm:$0xff]
  %v310 = vld [vmem:[%s5 + $0x88] sm:$0xf]
  %v311 = vld [vmem:[%s5 + $0x8c] sm:$0xff]
  %v312 = vld [vmem:[%s5 + $0x94] sm:$0xff]
  %v313 = vld [vmem:[%s5 + $0x9c] sm:$0xff]
  %v314 = vld [vmem:[%s5 + $0xa4] sm:$0xf]
  %v315 = vld [vmem:[%s5 + $0xa8] sm:$0xff]
  %v316 = vld [vmem:[%s5 + $0xb0] sm:$0xff]
  %v317 = vld [vmem:[%s5 + $0xb8] sm:$0xff]
  %v318 = vld [vmem:[%s5 + $0xc0] sm:$0xf]
  %v319 = vld [vmem:[%s5 + $0xc4] sm:$0xff]
  %v320 = vld [vmem:[%s5 + $0xcc] sm:$0xff]
  %v321 = vld [vmem:[%s5 + $0xd4] sm:$0xff]
  %v322 = vld [vmem:[%s5 + $0xdc] sm:$0xf]
  %v323 = vld [vmem:[%s5 + $0xe0] sm:$0xff]
  %v324 = vld [vmem:[%s5 + $0xe8] sm:$0xff]
  %v325 = vld [vmem:[%s5 + $0xf0] sm:$0xff]
  %v326 = vld [vmem:[%s5 + $0xf8] sm:$0xf]
  %v327 = vld [vmem:[%s5 + $0xfc] sm:$0xff]
  %v328 = vld [vmem:[%s5 + $0x104] sm:$0xff]
  %v329 = vld [vmem:[%s5 + $0x10c] sm:$0xff]
  %v330 = vld [vmem:[%s5 + $0x114] sm:$0xf]
  %v331 = vld [vmem:[%s5 + $0x118] sm:$0xff]
  %v332 = vld [vmem:[%s5 + $0x120] sm:$0xff]
  %v333 = vld [vmem:[%s5 + $0x128] sm:$0xff]
  %v334 = vld [vmem:[%s5 + $0x130] sm:$0xf]
  %v335 = vld [vmem:[%s5 + $0x134] sm:$0xff]
  %v336 = vld [vmem:[%s5 + $0x13c] sm:$0xff]
  %v337 = vld [vmem:[%s5 + $0x144] sm:$0xff]
  %v338 = vld [vmem:[%s5 + $0x14c] sm:$0xf]
  %v339 = vld [vmem:[%s5 + $0x150] sm:$0xff]
  %v340 = vld [vmem:[%s5 + $0x158] sm:$0xff]
  %v341 = vld [vmem:[%s5 + $0x160] sm:$0xff]
  %v342 = vld [vmem:[%s5 + $0x168] sm:$0xf]
  %v343 = vld [vmem:[%s5 + $0x16c] sm:$0xff]
  %v344 = vld [vmem:[%s5 + $0x174] sm:$0xff]
  %v345 = vld [vmem:[%s5 + $0x17c] sm:$0xff]
  %v346 = vld [vmem:[%s5 + $0x184] sm:$0xf]
  %v347 = vld [vmem:[%s5 + $0x188] sm:$0xff]
  %v348 = vld [vmem:[%s5 + $0x190] sm:$0xff]
  %v349 = vld [vmem:[%s5 + $0x198] sm:$0xff]
  %v350 = vld [vmem:[%s5 + $0x1a0] sm:$0xf]
  %v351 = vld [vmem:[%s5 + $0x1a4] sm:$0xff]
  %v352 = vld [vmem:[%s5 + $0x1ac] sm:$0xff]
  %v353 = vld [vmem:[%s5 + $0x1b4] sm:$0xff]
  %v354 = vld [vmem:[%s5 + $0x1bc] sm:$0xf]
  %v355 = vld [vmem:[%s5 + $0x1c0] sm:$0xff]
  %v356 = vld [vmem:[%s5 + $0x1c8] sm:$0xff]
  %v357 = vld [vmem:[%s5 + $0x1d0] sm:$0xff]
  %v358 = vld [vmem:[%s5 + $0x1d8] sm:$0xf]
  %v359 = vld [vmem:[%s5 + $0x1dc] sm:$0xff]
  %v360 = vld [vmem:[%s5 + $0x1e4] sm:$0xff]
  %v361 = vld [vmem:[%s5 + $0x1ec] sm:$0xff]
  %v362 = vld [vmem:[%s5 + $0x1f4] sm:$0xf]
  %v363 = vld [vmem:[%s5 + $0x1f8] sm:$0xff]
  %v364 = vld [vmem:[%s5 + $0x200] sm:$0xff]
  %v365 = vld [vmem:[%s5 + $0x208] sm:$0xff]
  %v366 = vld [vmem:[%s5 + $0x210] sm:$0xf]
  %v367 = vld [vmem:[%s5 + $0x214] sm:$0xff]
  %v368 = vld [vmem:[%s5 + $0x21c] sm:$0xff]
  %v369 = vld [vmem:[%s5 + $0x224] sm:$0xff]
  %v370 = vld [vmem:[%s5 + $0x22c] sm:$0xf]
  %v371 = vld [vmem:[%s5 + $0x230] sm:$0xff]
  %v372 = vld [vmem:[%s5 + $0x238] sm:$0xff]
  %v373 = vld [vmem:[%s5 + $0x240] sm:$0xff]
  %v374 = vld [vmem:[%s5 + $0x248] sm:$0xf]
  %v375 = vld [vmem:[%s5 + $0x24c] sm:$0xff]
  %v376 = vld [vmem:[%s5 + $0x254] sm:$0xff]
  %v377 = vld [vmem:[%s5 + $0x25c] sm:$0xff]
  %v378 = vld [vmem:[%s5 + $0x264] sm:$0xf]
  %v379 = vld [vmem:[%s5 + $0x268] sm:$0xff]
  %v380 = vld [vmem:[%s5 + $0x270] sm:$0xff]
  %v381 = vld [vmem:[%s5 + $0x278] sm:$0xff]
  %v382 = vld [vmem:[%s5 + $0x280] sm:$0xf]
  %v383 = vld [vmem:[%s5 + $0x284] sm:$0xff]
  %v384 = vld [vmem:[%s5 + $0x28c] sm:$0xff]
  %v385 = vld [vmem:[%s5 + $0x294] sm:$0xff]
  %v386 = vld [vmem:[%s5 + $0x29c] sm:$0xf]
  %v387 = vld [vmem:[%s5 + $0x2a0] sm:$0xff]
  %v388 = vld [vmem:[%s5 + $0x2a8] sm:$0xff]
  %v389 = vld [vmem:[%s5 + $0x2b0] sm:$0xff]
  %v390 = vld [vmem:[%s5 + $0x2b8] sm:$0xf]
  %v391 = vld [vmem:[%s5 + $0x2bc] sm:$0xff]
  %v392 = vld [vmem:[%s5 + $0x2c4] sm:$0xff]
  %v393 = vld [vmem:[%s5 + $0x2cc] sm:$0xff]
  %v394 = vld [vmem:[%s5 + $0x2d4] sm:$0xf]
  %v395 = vld [vmem:[%s5 + $0x2d8] sm:$0xff]
  %v396 = vld [vmem:[%s5 + $0x2e0] sm:$0xff]
  %v397 = vld [vmem:[%s5 + $0x2e8] sm:$0xff]
  %v398 = vld [vmem:[%s5 + $0x2f0] sm:$0xf]
  %v399 = vld [vmem:[%s5 + $0x2f4] sm:$0xff]
  %v400 = vld [vmem:[%s5 + $0x2fc] sm:$0xff]
  %v401 = vld [vmem:[%s5 + $0x304] sm:$0xff]
  %v402 = vld [vmem:[%s5 + $0x30c] sm:$0xf]
  %v403 = vld [vmem:[%s5 + $0x310] sm:$0xff]
  %v404 = vld [vmem:[%s5 + $0x318] sm:$0xff]
  %v405 = vld [vmem:[%s5 + $0x320] sm:$0xff]
  %v406 = vld [vmem:[%s5 + $0x328] sm:$0xf]
  %v407 = vld [vmem:[%s5 + $0x32c] sm:$0xff]
  %v408 = vld [vmem:[%s5 + $0x334] sm:$0xff]
  %v409 = vld [vmem:[%s5 + $0x33c] sm:$0xff]
  %v410 = vld [vmem:[%s5 + $0x344] sm:$0xf]
  %v411 = vld [vmem:[%s5 + $0x348] sm:$0xff]
  %v412 = vld [vmem:[%s5 + $0x350] sm:$0xff]
  %v413 = vld [vmem:[%s5 + $0x358] sm:$0xff]
  %v414 = vld [vmem:[%s5 + $0x360] sm:$0xf]
  %v415 = vld [vmem:[%s5 + $0x364] sm:$0xff]
  %v416 = vld [vmem:[%s5 + $0x36c] sm:$0xff]
  %v417 = vld [vmem:[%s5 + $0x374] sm:$0xff]
  %v418 = vld [vmem:[%s5 + $0x37c] sm:$0xf]
  %v419 = vld [vmem:[%s6] sm:$0x7f]
  %v421 = vlaneseq
  %v422 = vshrl.u32 %v421, 7
  %v423 = vsub.s32 0, %v422
  %v424 = vrot.slane %v419, %v423
  %v425 = vlaneseq
  %v426 = vshrl.u32 %v425, 7
  %v427 = vsub.s32 1, %v426
  %v428 = vrot.slane %v419, %v427
  %v429 = vlaneseq
  %v430 = vshrl.u32 %v429, 7
  %v431 = vsub.s32 2, %v430
  %v432 = vrot.slane %v419, %v431
  %v433 = vlaneseq
  %v434 = vshrl.u32 %v433, 7
  %v435 = vsub.s32 3, %v434
  %v436 = vrot.slane %v419, %v435
  %v437 = vlaneseq
  %v438 = vshrl.u32 %v437, 7
  %v439 = vsub.s32 4, %v438
  %v440 = vrot.slane %v419, %v439
  %v441 = vlaneseq
  %v442 = vshrl.u32 %v441, 7
  %v443 = vsub.s32 5, %v442
  %v444 = vrot.slane %v419, %v443
  %v445 = vlaneseq
  %v446 = vshrl.u32 %v445, 7
  %v447 = vsub.s32 6, %v446
  %v448 = vrot.slane %v419, %v447
  %v584 = vunpack.c.l.b16 %v291
  %v585 = vunpack.c.h.b16 %v291
  %v586 = vunpack.c.l.b16 %v292
  %v587 = vunpack.c.h.b16 %v292
  %v588 = vunpack.c.l.b16 %v293
  %v589 = vunpack.c.h.b16 %v293
  %v590 = vunpack.c.l.b16 %v294
  %v591 = vunpack.c.l.b16 %v295
  %v592 = vunpack.c.h.b16 %v295
  %v593 = vunpack.c.l.b16 %v296
  %v594 = vunpack.c.h.b16 %v296
  %v595 = vunpack.c.l.b16 %v297
  %v596 = vunpack.c.h.b16 %v297
  %v597 = vunpack.c.l.b16 %v298
  %v598 = vunpack.c.l.b16 %v299
  %v599 = vunpack.c.h.b16 %v299
  %v600 = vunpack.c.l.b16 %v300
  %v601 = vunpack.c.h.b16 %v300
  %v602 = vunpack.c.l.b16 %v301
  %v603 = vunpack.c.h.b16 %v301
  %v604 = vunpack.c.l.b16 %v302
  %v605 = vunpack.c.l.b16 %v303
  %v606 = vunpack.c.h.b16 %v303
  %v607 = vunpack.c.l.b16 %v304
  %v608 = vunpack.c.h.b16 %v304
  %v609 = vunpack.c.l.b16 %v305
  %v610 = vunpack.c.h.b16 %v305
  %v611 = vunpack.c.l.b16 %v306
  %v612 = vunpack.c.l.b16 %v307
  %v613 = vunpack.c.h.b16 %v307
  %v614 = vunpack.c.l.b16 %v308
  %v615 = vunpack.c.h.b16 %v308
  %v616 = vunpack.c.l.b16 %v309
  %v617 = vunpack.c.h.b16 %v309
  %v618 = vunpack.c.l.b16 %v310
  %v619 = vunpack.c.l.b16 %v311
  %v620 = vunpack.c.h.b16 %v311
  %v621 = vunpack.c.l.b16 %v312
  %v622 = vunpack.c.h.b16 %v312
  %v623 = vunpack.c.l.b16 %v313
  %v624 = vunpack.c.h.b16 %v313
  %v625 = vunpack.c.l.b16 %v314
  %v626 = vunpack.c.l.b16 %v315
  %v627 = vunpack.c.h.b16 %v315
  %v628 = vunpack.c.l.b16 %v316
  %v629 = vunpack.c.h.b16 %v316
  %v630 = vunpack.c.l.b16 %v317
  %v631 = vunpack.c.h.b16 %v317
  %v632 = vunpack.c.l.b16 %v318
  %v633 = vunpack.c.l.b16 %v319
  %v634 = vunpack.c.h.b16 %v319
  %v635 = vunpack.c.l.b16 %v320
  %v636 = vunpack.c.h.b16 %v320
  %v637 = vunpack.c.l.b16 %v321
  %v638 = vunpack.c.h.b16 %v321
  %v639 = vunpack.c.l.b16 %v322
  %v640 = vunpack.c.l.b16 %v323
  %v641 = vunpack.c.h.b16 %v323
  %v642 = vunpack.c.l.b16 %v324
  %v643 = vunpack.c.h.b16 %v324
  %v644 = vunpack.c.l.b16 %v325
  %v645 = vunpack.c.h.b16 %v325
  %v646 = vunpack.c.l.b16 %v326
  %v647 = vunpack.c.l.b16 %v327
  %v648 = vunpack.c.h.b16 %v327
  %v649 = vunpack.c.l.b16 %v328
  %v650 = vunpack.c.h.b16 %v328
  %v651 = vunpack.c.l.b16 %v329
  %v652 = vunpack.c.h.b16 %v329
  %v653 = vunpack.c.l.b16 %v330
  %v654 = vunpack.c.l.b16 %v331
  %v655 = vunpack.c.h.b16 %v331
  %v656 = vunpack.c.l.b16 %v332
  %v657 = vunpack.c.h.b16 %v332
  %v658 = vunpack.c.l.b16 %v333
  %v659 = vunpack.c.h.b16 %v333
  %v660 = vunpack.c.l.b16 %v334
  %v661 = vunpack.c.l.b16 %v335
  %v662 = vunpack.c.h.b16 %v335
  %v663 = vunpack.c.l.b16 %v336
  %v664 = vunpack.c.h.b16 %v336
  %v665 = vunpack.c.l.b16 %v337
  %v666 = vunpack.c.h.b16 %v337
  %v667 = vunpack.c.l.b16 %v338
  %v668 = vunpack.c.l.b16 %v339
  %v669 = vunpack.c.h.b16 %v339
  %v670 = vunpack.c.l.b16 %v340
  %v671 = vunpack.c.h.b16 %v340
  %v672 = vunpack.c.l.b16 %v341
  %v673 = vunpack.c.h.b16 %v341
  %v674 = vunpack.c.l.b16 %v342
  %v675 = vunpack.c.l.b16 %v343
  %v676 = vunpack.c.h.b16 %v343
  %v677 = vunpack.c.l.b16 %v344
  %v678 = vunpack.c.h.b16 %v344
  %v679 = vunpack.c.l.b16 %v345
  %v680 = vunpack.c.h.b16 %v345
  %v681 = vunpack.c.l.b16 %v346
  %v682 = vunpack.c.l.b16 %v347
  %v683 = vunpack.c.h.b16 %v347
  %v684 = vunpack.c.l.b16 %v348
  %v685 = vunpack.c.h.b16 %v348
  %v686 = vunpack.c.l.b16 %v349
  %v687 = vunpack.c.h.b16 %v349
  %v688 = vunpack.c.l.b16 %v350
  %v689 = vunpack.c.l.b16 %v351
  %v690 = vunpack.c.h.b16 %v351
  %v691 = vunpack.c.l.b16 %v352
  %v692 = vunpack.c.h.b16 %v352
  %v693 = vunpack.c.l.b16 %v353
  %v694 = vunpack.c.h.b16 %v353
  %v695 = vunpack.c.l.b16 %v354
  %v696 = vunpack.c.l.b16 %v355
  %v697 = vunpack.c.h.b16 %v355
  %v698 = vunpack.c.l.b16 %v356
  %v699 = vunpack.c.h.b16 %v356
  %v700 = vunpack.c.l.b16 %v357
  %v701 = vunpack.c.h.b16 %v357
  %v702 = vunpack.c.l.b16 %v358
  %v703 = vunpack.c.l.b16 %v359
  %v704 = vunpack.c.h.b16 %v359
  %v705 = vunpack.c.l.b16 %v360
  %v706 = vunpack.c.h.b16 %v360
  %v707 = vunpack.c.l.b16 %v361
  %v708 = vunpack.c.h.b16 %v361
  %v709 = vunpack.c.l.b16 %v362
  %v710 = vunpack.c.l.b16 %v363
  %v711 = vunpack.c.h.b16 %v363
  %v712 = vunpack.c.l.b16 %v364
  %v713 = vunpack.c.h.b16 %v364
  %v714 = vunpack.c.l.b16 %v365
  %v715 = vunpack.c.h.b16 %v365
  %v716 = vunpack.c.l.b16 %v366
  %v717 = vunpack.c.l.b16 %v367
  %v718 = vunpack.c.h.b16 %v367
  %v719 = vunpack.c.l.b16 %v368
  %v720 = vunpack.c.h.b16 %v368
  %v721 = vunpack.c.l.b16 %v369
  %v722 = vunpack.c.h.b16 %v369
  %v723 = vunpack.c.l.b16 %v370
  %v724 = vunpack.c.l.b16 %v371
  %v725 = vunpack.c.h.b16 %v371
  %v726 = vunpack.c.l.b16 %v372
  %v727 = vunpack.c.h.b16 %v372
  %v728 = vunpack.c.l.b16 %v373
  %v729 = vunpack.c.h.b16 %v373
  %v730 = vunpack.c.l.b16 %v374
  %v731 = vunpack.c.l.b16 %v375
  %v732 = vunpack.c.h.b16 %v375
  %v733 = vunpack.c.l.b16 %v376
  %v734 = vunpack.c.h.b16 %v376
  %v735 = vunpack.c.l.b16 %v377
  %v736 = vunpack.c.h.b16 %v377
  %v737 = vunpack.c.l.b16 %v378
  %v738 = vunpack.c.l.b16 %v379
  %v739 = vunpack.c.h.b16 %v379
  %v740 = vunpack.c.l.b16 %v380
  %v741 = vunpack.c.h.b16 %v380
  %v742 = vunpack.c.l.b16 %v381
  %v743 = vunpack.c.h.b16 %v381
  %v744 = vunpack.c.l.b16 %v382
  %v745 = vunpack.c.l.b16 %v383
  %v746 = vunpack.c.h.b16 %v383
  %v747 = vunpack.c.l.b16 %v384
  %v748 = vunpack.c.h.b16 %v384
  %v749 = vunpack.c.l.b16 %v385
  %v750 = vunpack.c.h.b16 %v385
  %v751 = vunpack.c.l.b16 %v386
  %v752 = vunpack.c.l.b16 %v387
  %v753 = vunpack.c.h.b16 %v387
  %v754 = vunpack.c.l.b16 %v388
  %v755 = vunpack.c.h.b16 %v388
  %v756 = vunpack.c.l.b16 %v389
  %v757 = vunpack.c.h.b16 %v389
  %v758 = vunpack.c.l.b16 %v390
  %v759 = vunpack.c.l.b16 %v391
  %v760 = vunpack.c.h.b16 %v391
  %v761 = vunpack.c.l.b16 %v392
  %v762 = vunpack.c.h.b16 %v392
  %v763 = vunpack.c.l.b16 %v393
  %v764 = vunpack.c.h.b16 %v393
  %v765 = vunpack.c.l.b16 %v394
  %v766 = vunpack.c.l.b16 %v395
  %v767 = vunpack.c.h.b16 %v395
  %v768 = vunpack.c.l.b16 %v396
  %v769 = vunpack.c.h.b16 %v396
  %v770 = vunpack.c.l.b16 %v397
  %v771 = vunpack.c.h.b16 %v397
  %v772 = vunpack.c.l.b16 %v398
  %v773 = vunpack.c.l.b16 %v399
  %v774 = vunpack.c.h.b16 %v399
  %v775 = vunpack.c.l.b16 %v400
  %v776 = vunpack.c.h.b16 %v400
  %v777 = vunpack.c.l.b16 %v401
  %v778 = vunpack.c.h.b16 %v401
  %v779 = vunpack.c.l.b16 %v402
  %v780 = vunpack.c.l.b16 %v403
  %v781 = vunpack.c.h.b16 %v403
  %v782 = vunpack.c.l.b16 %v404
  %v783 = vunpack.c.h.b16 %v404
  %v784 = vunpack.c.l.b16 %v405
  %v785 = vunpack.c.h.b16 %v405
  %v786 = vunpack.c.l.b16 %v406
  %v787 = vunpack.c.l.b16 %v407
  %v788 = vunpack.c.h.b16 %v407
  %v789 = vunpack.c.l.b16 %v408
  %v790 = vunpack.c.h.b16 %v408
  %v791 = vunpack.c.l.b16 %v409
  %v792 = vunpack.c.h.b16 %v409
  %v793 = vunpack.c.l.b16 %v410
  %v794 = vunpack.c.l.b16 %v411
  %v795 = vunpack.c.h.b16 %v411
  %v796 = vunpack.c.l.b16 %v412
  %v797 = vunpack.c.h.b16 %v412
  %v798 = vunpack.c.l.b16 %v413
  %v799 = vunpack.c.h.b16 %v413
  %v800 = vunpack.c.l.b16 %v414
  %v801 = vunpack.c.l.b16 %v415
  %v802 = vunpack.c.h.b16 %v415
  %v803 = vunpack.c.l.b16 %v416
  %v804 = vunpack.c.h.b16 %v416
  %v805 = vunpack.c.l.b16 %v417
  %v806 = vunpack.c.h.b16 %v417
  %v807 = vunpack.c.l.b16 %v418
  %v808 = vpack.c.b16 %v591, %v584
  %v809 = vpack.c.b16 %v592, %v585
  %v810 = vpack.c.b16 %v593, %v586
  %v811 = vpack.c.b16 %v594, %v587
  %v812 = vpack.c.b16 %v595, %v588
  %v813 = vpack.c.b16 %v596, %v589
  %v814 = vpack.c.b16 %v597, %v590
  %v815 = vpack.c.b16 %v605, %v598
  %v816 = vpack.c.b16 %v606, %v599
  %v817 = vpack.c.b16 %v607, %v600
  %v818 = vpack.c.b16 %v608, %v601
  %v819 = vpack.c.b16 %v609, %v602
  %v820 = vpack.c.b16 %v610, %v603
  %v821 = vpack.c.b16 %v611, %v604
  %v822 = vpack.c.b16 %v619, %v612
  %v823 = vpack.c.b16 %v620, %v613
  %v824 = vpack.c.b16 %v621, %v614
  %v825 = vpack.c.b16 %v622, %v615
  %v826 = vpack.c.b16 %v623, %v616
  %v827 = vpack.c.b16 %v624, %v617
  %v828 = vpack.c.b16 %v625, %v618
  %v829 = vpack.c.b16 %v633, %v626
  %v830 = vpack.c.b16 %v634, %v627
  %v831 = vpack.c.b16 %v635, %v628
  %v832 = vpack.c.b16 %v636, %v629
  %v833 = vpack.c.b16 %v637, %v630
  %v834 = vpack.c.b16 %v638, %v631
  %v835 = vpack.c.b16 %v639, %v632
  %v836 = vpack.c.b16 %v647, %v640
  %v837 = vpack.c.b16 %v648, %v641
  %v838 = vpack.c.b16 %v649, %v642
  %v839 = vpack.c.b16 %v650, %v643
  %v840 = vpack.c.b16 %v651, %v644
  %v841 = vpack.c.b16 %v652, %v645
  %v842 = vpack.c.b16 %v653, %v646
  %v843 = vpack.c.b16 %v661, %v654
  %v844 = vpack.c.b16 %v662, %v655
  %v845 = vpack.c.b16 %v663, %v656
  %v846 = vpack.c.b16 %v664, %v657
  %v847 = vpack.c.b16 %v665, %v658
  %v848 = vpack.c.b16 %v666, %v659
  %v849 = vpack.c.b16 %v667, %v660
  %v850 = vpack.c.b16 %v675, %v668
  %v851 = vpack.c.b16 %v676, %v669
  %v852 = vpack.c.b16 %v677, %v670
  %v853 = vpack.c.b16 %v678, %v671
  %v854 = vpack.c.b16 %v679, %v672
  %v855 = vpack.c.b16 %v680, %v673
  %v856 = vpack.c.b16 %v681, %v674
  %v857 = vpack.c.b16 %v689, %v682
  %v858 = vpack.c.b16 %v690, %v683
  %v859 = vpack.c.b16 %v691, %v684
  %v860 = vpack.c.b16 %v692, %v685
  %v861 = vpack.c.b16 %v693, %v686
  %v862 = vpack.c.b16 %v694, %v687
  %v863 = vpack.c.b16 %v695, %v688
  %v864 = vpack.c.b16 %v703, %v696
  %v865 = vpack.c.b16 %v704, %v697
  %v866 = vpack.c.b16 %v705, %v698
  %v867 = vpack.c.b16 %v706, %v699
  %v868 = vpack.c.b16 %v707, %v700
  %v869 = vpack.c.b16 %v708, %v701
  %v870 = vpack.c.b16 %v709, %v702
  %v871 = vpack.c.b16 %v717, %v710
  %v872 = vpack.c.b16 %v718, %v711
  %v873 = vpack.c.b16 %v719, %v712
  %v874 = vpack.c.b16 %v720, %v713
  %v875 = vpack.c.b16 %v721, %v714
  %v876 = vpack.c.b16 %v722, %v715
  %v877 = vpack.c.b16 %v723, %v716
  %v878 = vpack.c.b16 %v731, %v724
  %v879 = vpack.c.b16 %v732, %v725
  %v880 = vpack.c.b16 %v733, %v726
  %v881 = vpack.c.b16 %v734, %v727
  %v882 = vpack.c.b16 %v735, %v728
  %v883 = vpack.c.b16 %v736, %v729
  %v884 = vpack.c.b16 %v737, %v730
  %v885 = vpack.c.b16 %v745, %v738
  %v886 = vpack.c.b16 %v746, %v739
  %v887 = vpack.c.b16 %v747, %v740
  %v888 = vpack.c.b16 %v748, %v741
  %v889 = vpack.c.b16 %v749, %v742
  %v890 = vpack.c.b16 %v750, %v743
  %v891 = vpack.c.b16 %v751, %v744
  %v892 = vpack.c.b16 %v759, %v752
  %v893 = vpack.c.b16 %v760, %v753
  %v894 = vpack.c.b16 %v761, %v754
  %v895 = vpack.c.b16 %v762, %v755
  %v896 = vpack.c.b16 %v763, %v756
  %v897 = vpack.c.b16 %v764, %v757
  %v898 = vpack.c.b16 %v765, %v758
  %v899 = vpack.c.b16 %v773, %v766
  %v900 = vpack.c.b16 %v774, %v767
  %v901 = vpack.c.b16 %v775, %v768
  %v902 = vpack.c.b16 %v776, %v769
  %v903 = vpack.c.b16 %v777, %v770
  %v904 = vpack.c.b16 %v778, %v771
  %v905 = vpack.c.b16 %v779, %v772
  %v906 = vpack.c.b16 %v787, %v780
  %v907 = vpack.c.b16 %v788, %v781
  %v908 = vpack.c.b16 %v789, %v782
  %v909 = vpack.c.b16 %v790, %v783
  %v910 = vpack.c.b16 %v791, %v784
  %v911 = vpack.c.b16 %v792, %v785
  %v912 = vpack.c.b16 %v793, %v786
  %v913 = vpack.c.b16 %v801, %v794
  %v914 = vpack.c.b16 %v802, %v795
  %v915 = vpack.c.b16 %v803, %v796
  %v916 = vpack.c.b16 %v804, %v797
  %v917 = vpack.c.b16 %v805, %v798
  %v918 = vpack.c.b16 %v806, %v799
  %v919 = vpack.c.b16 %v807, %v800
  %1032 = vmatprep.subr.bf16.mxu0 %v858
  %1033 = vmatpush1.bf16.msra.mxu0 %v857
  %1034 = vmatprep.subr.bf16.mxu0 %v851
  %1035 = vmatpush1.bf16.msra.mxu0 %v850
  %1036 = vmatprep.subr.bf16.mxu0 %v844
  %1037 = vmatpush1.bf16.msra.mxu0 %v843
  %1038 = vmatprep.subr.bf16.mxu0 %v837
  %1039 = vmatpush1.bf16.msra.mxu0 %v836
  %1040 = vmatprep.subr.bf16.mxu0 %v830
  %1041 = vmatpush1.bf16.msra.mxu0 %v829
  %1042 = vmatprep.subr.bf16.mxu0 %v823
  %1043 = vmatpush1.bf16.msra.mxu0 %v822
  %1044 = vmatprep.subr.bf16.mxu0 %v816
  %1045 = vmatpush1.bf16.msra.mxu0 %v815
  %1046 = vmatprep.subr.bf16.mxu0 %v809
  %1047 = vmatpush1.bf16.msra.mxu0 %v808
  %1048 = vmatprep.subr.bf16.mxu0 %v914
  %1049 = vmatpush2.bf16.msra.mxu0 %v913
  %1050 = vmatprep.subr.bf16.mxu0 %v907
  %1051 = vmatpush2.bf16.msra.mxu0 %v906
  %1052 = vmatprep.subr.bf16.mxu0 %v900
  %1053 = vmatpush2.bf16.msra.mxu0 %v899
  %1054 = vmatprep.subr.bf16.mxu0 %v893
  %1055 = vmatpush2.bf16.msra.mxu0 %v892
  %1056 = vmatprep.subr.bf16.mxu0 %v886
  %1057 = vmatpush2.bf16.msra.mxu0 %v885
  %1058 = vmatprep.subr.bf16.mxu0 %v879
  %1059 = vmatpush2.bf16.msra.mxu0 %v878
  %1060 = vmatprep.subr.bf16.mxu0 %v872
  %1061 = vmatpush2.bf16.msra.mxu0 %v871
  %1062 = vmatprep.subr.bf16.mxu0 %v865
  %1063 = vmatpush2.bf16.msra.mxu0 %v864
  %1064 = vmatprep.mubr.bf16.mxu0 %v290
  %1065 = vmatmul.mubr.bf16.gmra.mxu0 %v289
  %v1066 = vpop.f32.mrf.mxu0
  %v1067 = vadd.f32 %v424, %v1066
  %v1068 = vpop.f32.mrf.mxu0
  %v1069 = vadd.f32 %v428, %v1068
  %v1070 = vpop.f32.mrf.mxu0
  %v1071 = vpop.f32.mrf.mxu0
  %1072 = vdwg.mxu0
  %1073 = vmatprep.subr.bf16.mxu0 %v860
  %1074 = vmatpush1.bf16.msra.mxu0 %v859
  %1075 = vmatprep.subr.bf16.mxu0 %v853
  %1076 = vmatpush1.bf16.msra.mxu0 %v852
  %1077 = vmatprep.subr.bf16.mxu0 %v846
  %1078 = vmatpush1.bf16.msra.mxu0 %v845
  %1079 = vmatprep.subr.bf16.mxu0 %v839
  %1080 = vmatpush1.bf16.msra.mxu0 %v838
  %1081 = vmatprep.subr.bf16.mxu0 %v832
  %1082 = vmatpush1.bf16.msra.mxu0 %v831
  %1083 = vmatprep.subr.bf16.mxu0 %v825
  %1084 = vmatpush1.bf16.msra.mxu0 %v824
  %1085 = vmatprep.subr.bf16.mxu0 %v818
  %1086 = vmatpush1.bf16.msra.mxu0 %v817
  %1087 = vmatprep.subr.bf16.mxu0 %v811
  %1088 = vmatpush1.bf16.msra.mxu0 %v810
  %1089 = vmatprep.subr.bf16.mxu0 %v916
  %1090 = vmatpush2.bf16.msra.mxu0 %v915
  %1091 = vmatprep.subr.bf16.mxu0 %v909
  %1092 = vmatpush2.bf16.msra.mxu0 %v908
  %1093 = vmatprep.subr.bf16.mxu0 %v902
  %1094 = vmatpush2.bf16.msra.mxu0 %v901
  %1095 = vmatprep.subr.bf16.mxu0 %v895
  %1096 = vmatpush2.bf16.msra.mxu0 %v894
  %1097 = vmatprep.subr.bf16.mxu0 %v888
  %1098 = vmatpush2.bf16.msra.mxu0 %v887
  %1099 = vmatprep.subr.bf16.mxu0 %v881
  %1100 = vmatpush2.bf16.msra.mxu0 %v880
  %1101 = vmatprep.subr.bf16.mxu0 %v874
  %1102 = vmatpush2.bf16.msra.mxu0 %v873
  %1103 = vmatprep.subr.bf16.mxu0 %v867
  %1104 = vmatpush2.bf16.msra.mxu0 %v866
  %1105 = vmatprep.mubr.bf16.mxu0 %v290
  %1106 = vmatmul.mubr.bf16.gmra.mxu0 %v289
  %v1107 = vpop.f32.mrf.mxu0
  %v1108 = vadd.f32 %v432, %v1107
  %v1109 = vpop.f32.mrf.mxu0
  %v1110 = vadd.f32 %v436, %v1109
  %v1111 = vpop.f32.mrf.mxu0
  %v1112 = vpop.f32.mrf.mxu0
  %1113 = vdwg.mxu0
  %1114 = vmatprep.subr.bf16.mxu0 %v862
  %1115 = vmatpush1.bf16.msra.mxu0 %v861
  %1116 = vmatprep.subr.bf16.mxu0 %v855
  %1117 = vmatpush1.bf16.msra.mxu0 %v854
  %1118 = vmatprep.subr.bf16.mxu0 %v848
  %1119 = vmatpush1.bf16.msra.mxu0 %v847
  %1120 = vmatprep.subr.bf16.mxu0 %v841
  %1121 = vmatpush1.bf16.msra.mxu0 %v840
  %1122 = vmatprep.subr.bf16.mxu0 %v834
  %1123 = vmatpush1.bf16.msra.mxu0 %v833
  %1124 = vmatprep.subr.bf16.mxu0 %v827
  %1125 = vmatpush1.bf16.msra.mxu0 %v826
  %1126 = vmatprep.subr.bf16.mxu0 %v820
  %1127 = vmatpush1.bf16.msra.mxu0 %v819
  %1128 = vmatprep.subr.bf16.mxu0 %v813
  %1129 = vmatpush1.bf16.msra.mxu0 %v812
  %1130 = vmatprep.subr.bf16.mxu0 %v918
  %1131 = vmatpush2.bf16.msra.mxu0 %v917
  %1132 = vmatprep.subr.bf16.mxu0 %v911
  %1133 = vmatpush2.bf16.msra.mxu0 %v910
  %1134 = vmatprep.subr.bf16.mxu0 %v904
  %1135 = vmatpush2.bf16.msra.mxu0 %v903
  %1136 = vmatprep.subr.bf16.mxu0 %v897
  %1137 = vmatpush2.bf16.msra.mxu0 %v896
  %1138 = vmatprep.subr.bf16.mxu0 %v890
  %1139 = vmatpush2.bf16.msra.mxu0 %v889
  %1140 = vmatprep.subr.bf16.mxu0 %v883
  %1141 = vmatpush2.bf16.msra.mxu0 %v882
  %1142 = vmatprep.subr.bf16.mxu0 %v876
  %1143 = vmatpush2.bf16.msra.mxu0 %v875
  %1144 = vmatprep.subr.bf16.mxu0 %v869
  %1145 = vmatpush2.bf16.msra.mxu0 %v868
  %1146 = vmatprep.mubr.bf16.mxu0 %v290
  %1147 = vmatmul.mubr.bf16.gmra.mxu0 %v289
  %v1148 = vpop.f32.mrf.mxu0
  %v1149 = vadd.f32 %v440, %v1148
  %v1150 = vpop.f32.mrf.mxu0
  %v1151 = vadd.f32 %v444, %v1150
  %v1152 = vpop.f32.mrf.mxu0
  %v1153 = vpop.f32.mrf.mxu0
  %1154 = vdwg.mxu0
  %1155 = vmatprep.subr.bf16.mxu0 0
  %1156 = vmatpush1.bf16.msra.mxu0 %v863
  %1157 = vmatprep.subr.bf16.mxu0 0
  %1158 = vmatpush1.bf16.msra.mxu0 %v856
  %1159 = vmatprep.subr.bf16.mxu0 0
  %1160 = vmatpush1.bf16.msra.mxu0 %v849
  %1161 = vmatprep.subr.bf16.mxu0 0
  %1162 = vmatpush1.bf16.msra.mxu0 %v842
  %1163 = vmatprep.subr.bf16.mxu0 0
  %1164 = vmatpush1.bf16.msra.mxu0 %v835
  %1165 = vmatprep.subr.bf16.mxu0 0
  %1166 = vmatpush1.bf16.msra.mxu0 %v828
  %1167 = vmatprep.subr.bf16.mxu0 0
  %1168 = vmatpush1.bf16.msra.mxu0 %v821
  %1169 = vmatprep.subr.bf16.mxu0 0
  %1170 = vmatpush1.bf16.msra.mxu0 %v814
  %1171 = vmatprep.subr.bf16.mxu0 0
  %1172 = vmatpush2.bf16.msra.mxu0 %v919
  %1173 = vmatprep.subr.bf16.mxu0 0
  %1174 = vmatpush2.bf16.msra.mxu0 %v912
  %1175 = vmatprep.subr.bf16.mxu0 0
  %1176 = vmatpush2.bf16.msra.mxu0 %v905
  %1177 = vmatprep.subr.bf16.mxu0 0
  %1178 = vmatpush2.bf16.msra.mxu0 %v898
  %1179 = vmatprep.subr.bf16.mxu0 0
  %1180 = vmatpush2.bf16.msra.mxu0 %v891
  %1181 = vmatprep.subr.bf16.mxu0 0
  %1182 = vmatpush2.bf16.msra.mxu0 %v884
  %1183 = vmatprep.subr.bf16.mxu0 0
  %1184 = vmatpush2.bf16.msra.mxu0 %v877
  %1185 = vmatprep.subr.bf16.mxu0 0
  %1186 = vmatpush2.bf16.msra.mxu0 %v870
  %1187 = vmatprep.mubr.bf16.mxu0 %v290
  %1188 = vmatmul.mubr.bf16.gmra.mxu0 %v289
  %v1189 = vpop.f32.mrf.mxu0
  %v1190 = vadd.f32 %v448, %v1189
  %v1191 = vpop.f32.mrf.mxu0
  %v1192 = vpop.f32.mrf.mxu0
  %v1193 = vpop.f32.mrf.mxu0
  %1194 = vdwg.mxu0
  %v1195 = vtanh.pop %v1067
  %v1196 = vtanh.pop %v1069
  %v1197 = vtanh.pop %v1108
  %v1198 = vtanh.pop %v1110
  %v1199 = vtanh.pop %v1149
  %v1200 = vtanh.pop %v1151
  %v1201 = vtanh.pop %v1190
  %1202 = vst [vmem:[%s7] sm:$0xff] %v1195
  %1203 = vst [vmem:[%s7 + $0x8] sm:$0xff] %v1196
  %1204 = vst [vmem:[%s7 + $0x10] sm:$0xff] %v1197
  %1205 = vst [vmem:[%s7 + $0x18] sm:$0xff] %v1198
  %1206 = vst [vmem:[%s7 + $0x20] sm:$0xff] %v1199
  %1207 = vst [vmem:[%s7 + $0x28] sm:$0xff] %v1200
  %vm1208 = vcmask 130048
  %1209 = vst.msk [vmem:[%s7 + $0x30] sm:$0xff] %vm1208, %v1201
  // Predicated region
  $region30: #{generator_forward.1} parent=0 // pred_check
    _
  $region31: #{generator_forward.1} parent=0 // pred_check_branch
    %1211 = sbr.rel (0) target = $region33
  $region32: #{generator_forward.1} parent=0 // pred_region
    _
  $region33: #{generator_forward.1} parent=0 // pred_fallthru
    _
  // Predicated region
  $region34: #{generator_forward.1} parent=0 // pred_check
    _
  $region35: #{generator_forward.1} parent=0 // pred_check_branch
    %1213 = sbr.rel (0) target = $region37
  $region36: #{generator_forward.1} parent=0 // pred_region
    _
  $region37: #{generator_forward.1} parent=0 // pred_fallthru
    _

</llo_original>
